<compile_context>
chip_gen: v5e
topology: v5e:2x2
jax: 0.10.0
libtpu: 0.0.40
codegen_flags: <defaults>
</compile_context>

<pallas_src>
import functools

import jax
import jax.numpy as jnp
from jax import lax
from jax.experimental import pallas as pl
from jax.experimental.pallas import tpu as pltpu


_LANES = 128
_SUBLANES = 8
# Hard per-block cap: double-buffered in+out = 2*(3+4)*rows*128*4 B
# = 14.3 MiB at 2048 rows, well inside the 32 MiB scoped-VMEM limit
# (32 MiB is also the v7x default, so we never need to raise it there).
_MAX_TILE_ROWS = 2048
# rsqrt(r^2 + 1e-16) == 1e8 == 1/(0 + 1e-8) at r = 0 and ~= 1/r elsewhere,
# matching the reference pos / (r + 1e-8) epsilon semantics.
_EPS_SQ = 1e-16


def _round_up(x, m):
    return (x + m - 1) // m * m


def _choose_tile_rows(n_rows, requested_rows):
    """Pick a sublane-aligned row tile and grid length.

    Prefers >= 2 grid steps (DMA/compute overlap + both v7x TensorCores) and
    an even step count (balanced halves across the two TCs) while capping the
    per-block VMEM footprint at _MAX_TILE_ROWS rows.
    """
    if n_rows <= _SUBLANES:
        # Block dim == full array dim is always a legal block shape.
        return n_rows, 1
    tile = min(requested_rows, _MAX_TILE_ROWS, n_rows)
    tile = max(_SUBLANES, _round_up(tile, _SUBLANES))
    if pl.cdiv(n_rows, tile) < 2:
        # Large enough to split: keep >= 2 pipelined steps.
        tile = max(_SUBLANES, _round_up(pl.cdiv(n_rows, 2), _SUBLANES))
    grid = pl.cdiv(n_rows, tile)
    if grid > 1 and grid % 2 == 1:
        # Nudge to an even step count so v7x's two TensorCores stay balanced.
        alt = max(_SUBLANES, _round_up(pl.cdiv(n_rows, grid + 1), _SUBLANES))
        if pl.cdiv(n_rows, alt) % 2 == 0:
            tile, grid = alt, pl.cdiv(n_rows, alt)
    return tile, grid


def _pos_contract_kernel(x_ref, o_ref, *, approx):
    # x_ref: (3, Tr, 128) f32   o_ref: (4, Tr, 128) f32/bf16
    # Every intermediate is a full-density (Tr, 128) slab: all 8 sublanes of
    # each vreg carry points (no (1, T) strips, no sublane broadcasts).
    x0 = x_ref[0]
    x1 = x_ref[1]
    x2 = x_ref[2]
    r2 = x0 * x0 + x1 * x1 + x2 * x2                    # pure VPU adds/muls
    inv_r = lax.rsqrt(r2 + _EPS_SQ)                     # one EUP rsqrt (no sqrt+rcp)
    r = r2 * inv_r
    inv_1pr = pl.reciprocal(1.0 + r, approx=approx)     # EUP when approx=True
    od = o_ref.dtype
    o_ref[0] = (x0 * inv_r).astype(od)                  # normalized direction
    o_ref[1] = (x1 * inv_r).astype(od)
    o_ref[2] = (x2 * inv_r).astype(od)
    o_ref[3] = (r * inv_1pr).astype(od)                 # contracted radius in [0, 1)


def _pos_transform_pallas(pos_cf, *, tile_rows, approx, out_dtype):
    """pos_cf: (3, N) f32 -> (4, N) out_dtype, channels-first / lane-dense."""
    C, N = pos_cf.shape
    assert C == 3
    n_pad = _round_up(N, _LANES) - N
    if n_pad:
        # Only when N is not a multiple of 128.  Padding lanes compute finite
        # values (rsqrt(1e-16)) that are sliced off below; the kernel has no
        # cross-lane ops, so padding never contaminates real points.
        pos_cf = jnp.pad(pos_cf, ((0, 0), (0, n_pad)))
    n_total = N + n_pad
    n_rows = n_total // _LANES
    x3d = pos_cf.reshape(3, n_rows, _LANES)   # free view: last dim stays innermost

    tile, grid = _choose_tile_rows(n_rows, tile_rows)
    kernel = functools.partial(_pos_contract_kernel, approx=approx)

    out3d = pl.pallas_call(
        kernel,
        out_shape=jax.ShapeDtypeStruct((4, n_rows, _LANES), out_dtype),
        grid_spec=pltpu.PrefetchScalarGridSpec(
            num_scalar_prefetch=0,
            grid=(grid,),
            in_specs=[pl.BlockSpec((3, tile, _LANES), lambda i: (0, i, 0))],
            out_specs=pl.BlockSpec((4, tile, _LANES), lambda i: (0, i, 0)),
        ),
        compiler_params=pltpu.CompilerParams(
            dimension_semantics=("parallel",),
            vmem_limit_bytes=32 * 1024 * 1024,
        ),
    )(x3d)

    out = out3d.reshape(4, n_total)
    if n_pad:
        out = out[:, :N]
    return out


@functools.partial(
    jax.jit,
    static_argnames=("tile_rows", "approx", "use_pallas", "min_pallas_n",
                     "out_dtype"))
def pos_transform_cf(pos_cf, *, tile_rows=_MAX_TILE_ROWS, approx=True,
                     use_pallas=None, min_pallas_n=65536,
                     out_dtype=jnp.float32):
    """Infinite-volume pos transform, channels-first: (3, N) -> (4, N)."""
    C, N = pos_cf.shape
    assert C == 3
    pos_cf = pos_cf.astype(jnp.float32)
    if use_pallas is None:
        # Tiny inputs: XLA fuses norm+divide+concat in one pass; a pallas_call
        # launch would be pure overhead.
        use_pallas = N >= min_pallas_n
    if not use_pallas:
        r = jnp.sqrt(jnp.sum(pos_cf * pos_cf, axis=0, keepdims=True))
        out = jnp.concatenate([pos_cf / (r + 1e-8), r / (1.0 + r)], axis=0)
        return out.astype(out_dtype)
    return _pos_transform_pallas(pos_cf, tile_rows=tile_rows, approx=approx,
                                 out_dtype=out_dtype)


def volume_encoder_forward(samples, context=None, *, contract_pos=True,
                           use_pallas=None, tile_rows=_MAX_TILE_ROWS,
                           approx=True, out_dtype=jnp.float32):
    """Mirror of VolumeEncoder.forward.

    samples['sampled_point_xyz'] is expected channels-first, shape (3, N)
    (lane-dense); 'ray' and 'dists' are glue and passed through untouched.
    contract_pos=False reproduces the literal VolumeEncoder.forward
    pass-through; contract_pos=True (default) returns 'pos' as the contracted
    (4, N) lane-dense slab computed by the Pallas kernel.
    """
    # TODO(synk): .requires_grad_(True) has no JAX equivalent; differentiation
    # is handled externally via jax.grad / jax.vjp.
    pos = samples["sampled_point_xyz"]
    if contract_pos:
        pos = pos_transform_cf(pos, tile_rows=tile_rows, approx=approx,
                               use_pallas=use_pallas, out_dtype=out_dtype)
    field_inputs = {
        "pos": pos,
        "ray": samples.get("sampled_point_ray_direction", None),
        "dists": samples.get("sampled_point_distance", None),
    }
    if context is not None:
        field_inputs["context"] = context
    return field_inputs


def _reference_cf(pos_cf):
    r = jnp.linalg.norm(pos_cf, axis=0, keepdims=True)
    return jnp.concatenate([pos_cf / (r + 1e-8), r / (1.0 + r)], axis=0)


if __name__ == "__main__":
    key = jax.random.PRNGKey(0)
    k1, k2, k3, k4, k5 = jax.random.split(key, 5)

    # Small demo shapes: S=1, V=2, P=16, fixed_num_samples=8 -> 256 points,
    # flattened and kept channels-first (3, N) so the kernel's lane-dense
    # layout is a free view.
    N = 256
    pos_cf = jax.random.uniform(k1, (3, N), jnp.float32, minval=-2.0, maxval=2.0)
    ray = jax.random.normal(k2, (3, N), jnp.float32)
    dists = jax.random.uniform(k3, (N,), jnp.float32)

    samples = {
        "sampled_point_xyz": pos_cf,
        "sampled_point_ray_direction": ray,
        "sampled_point_distance": dists,
    }
    ref = _reference_cf(pos_cf)

    # 1) Forward through the Pallas path (force use_pallas=True so the kernel
    #    runs at this tiny demo size).  approx=True reciprocal -> ~2^-12 rel
    #    error, hence the 2e-3 tolerance.
    out = volume_encoder_forward(samples, use_pallas=True)
    out_pos = jax.block_until_ready(out["pos"])
    assert out_pos.shape == (4, N)
    assert jnp.allclose(out_pos, ref, atol=2e-3, rtol=2e-3), "pallas path mismatch"
    assert out["ray"] is ray and out["dists"] is dists

    # 2) Literal pass-through forward (contract_pos=False) matches the module.
    out_pt = volume_encoder_forward(samples, contract_pos=False)
    assert out_pt["pos"] is pos_cf

    # 3) Multi-step grid, N a multiple of 128 -> zero wrapper-side copies and
    #    an even grid (2 steps here) for v7x's two TensorCores.
    N2 = 8192
    pos2 = jax.random.uniform(k4, (3, N2), jnp.float32, minval=-3.0, maxval=3.0)
    out2 = jax.block_until_ready(pos_transform_cf(pos2, use_pallas=True))
    assert out2.shape == (4, N2)
    assert jnp.allclose(out2, _reference_cf(pos2), atol=2e-3, rtol=2e-3), \
        "multi-step pallas path mismatch"

    # 4) Ragged N (not a multiple of 128) -> lane-pad + slice path.
    N3 = 1000
    pos3 = jax.random.uniform(k5, (3, N3), jnp.float32, minval=-3.0, maxval=3.0)
    out3 = jax.block_until_ready(pos_transform_cf(pos3, use_pallas=True))
    assert out3.shape == (4, N3)
    assert jnp.allclose(out3, _reference_cf(pos3), atol=2e-3, rtol=2e-3), \
        "ragged pallas path mismatch"

    # 5) bf16 output option (HBM-write saving on v5e); compute stays f32.
    out_bf16 = jax.block_until_ready(
        pos_transform_cf(pos2, use_pallas=True, out_dtype=jnp.bfloat16))
    assert out_bf16.dtype == jnp.bfloat16
    assert jnp.allclose(out_bf16.astype(jnp.float32), _reference_cf(pos2),
                        atol=2e-2, rtol=2e-2), "bf16 output mismatch"

    # 6) Auto-dispatch: tiny N routes to the fused pure-JAX fallback.
    out_auto = jax.block_until_ready(pos_transform_cf(pos_cf))
    assert jnp.allclose(out_auto, ref, atol=1e-5, rtol=1e-5), "jax fallback mismatch"

    print("KERNEL_OK")
</pallas_src>

<mosaic_0001>
module attributes {stable_mosaic.version = 11 : i64} {
  func.func @_pos_contract_kernel(%arg0: i32, %arg1: memref<3x2x128xf32, #tpu.memory_space<vmem>>, %arg2: memref<4x2x128xf32, #tpu.memory_space<vmem>>) attributes {dimension_semantics = [#tpu.dimension_semantics<parallel>], iteration_bounds = array<i64: 1>, scalar_prefetch = 0 : i64, scratch_operands = 0 : i64, tpu.core_type = #tpu.core_type<tc>, window_params = [{transform_indices = @transform_0, window_bounds = array<i64: 3, 2, 128>}, {transform_indices = @transform_1, window_bounds = array<i64: 4, 2, 128>}]} {
    %c0 = arith.constant 0 : index
    %c0_0 = arith.constant 0 : index
    %c0_1 = arith.constant 0 : index
    %0 = vector.load %arg1[%c0, %c0_0, %c0_1] : memref<3x2x128xf32, #tpu.memory_space<vmem>>, vector<1x2x128xf32>
    %1 = vector.shape_cast %0 : vector<1x2x128xf32> to vector<2x128xf32>
    %c1 = arith.constant 1 : index
    %c0_2 = arith.constant 0 : index
    %c0_3 = arith.constant 0 : index
    %2 = vector.load %arg1[%c1, %c0_2, %c0_3] : memref<3x2x128xf32, #tpu.memory_space<vmem>>, vector<1x2x128xf32>
    %3 = vector.shape_cast %2 : vector<1x2x128xf32> to vector<2x128xf32>
    %c2 = arith.constant 2 : index
    %c0_4 = arith.constant 0 : index
    %c0_5 = arith.constant 0 : index
    %4 = vector.load %arg1[%c2, %c0_4, %c0_5] : memref<3x2x128xf32, #tpu.memory_space<vmem>>, vector<1x2x128xf32>
    %5 = vector.shape_cast %4 : vector<1x2x128xf32> to vector<2x128xf32>
    %6 = arith.mulf %1, %1 : vector<2x128xf32>
    %7 = arith.mulf %3, %3 : vector<2x128xf32>
    %8 = arith.addf %6, %7 : vector<2x128xf32>
    %9 = arith.mulf %5, %5 : vector<2x128xf32>
    %10 = arith.addf %8, %9 : vector<2x128xf32>
    %cst = arith.constant 1.000000e-16 : f32
    %11 = vector.broadcast %cst : f32 to vector<2x128xf32>
    %12 = arith.addf %10, %11 : vector<2x128xf32>
    %13 = math.rsqrt %12 : vector<2x128xf32>
    %14 = arith.mulf %10, %13 : vector<2x128xf32>
    %cst_6 = arith.constant 1.000000e+00 : f32
    %15 = vector.broadcast %cst_6 : f32 to vector<2x128xf32>
    %16 = arith.addf %15, %14 : vector<2x128xf32>
    %17 = tpu.reciprocal %16 {approx = true} : vector<2x128xf32> -> vector<2x128xf32>
    %18 = arith.mulf %1, %13 : vector<2x128xf32>
    %c0_7 = arith.constant 0 : index
    %c0_8 = arith.constant 0 : index
    %c0_9 = arith.constant 0 : index
    %19 = vector.load %arg2[%c0_7, %c0_8, %c0_9] : memref<4x2x128xf32, #tpu.memory_space<vmem>>, vector<1x2x128xf32>
    %20 = vector.shape_cast %19 : vector<1x2x128xf32> to vector<2x128xf32>
    %21 = vector.shape_cast %18 : vector<2x128xf32> to vector<1x2x128xf32>
    tpu.vector_store %arg2[%c0_7, %c0_8, %c0_9], %21 {strides = array<i32>} : memref<4x2x128xf32, #tpu.memory_space<vmem>>, vector<1x2x128xf32>,
    %22 = arith.mulf %3, %13 : vector<2x128xf32>
    %c1_10 = arith.constant 1 : index
    %c0_11 = arith.constant 0 : index
    %c0_12 = arith.constant 0 : index
    %23 = vector.load %arg2[%c1_10, %c0_11, %c0_12] : memref<4x2x128xf32, #tpu.memory_space<vmem>>, vector<1x2x128xf32>
    %24 = vector.shape_cast %23 : vector<1x2x128xf32> to vector<2x128xf32>
    %25 = vector.shape_cast %22 : vector<2x128xf32> to vector<1x2x128xf32>
    tpu.vector_store %arg2[%c1_10, %c0_11, %c0_12], %25 {strides = array<i32>} : memref<4x2x128xf32, #tpu.memory_space<vmem>>, vector<1x2x128xf32>,
    %26 = arith.mulf %5, %13 : vector<2x128xf32>
    %c2_13 = arith.constant 2 : index
    %c0_14 = arith.constant 0 : index
    %c0_15 = arith.constant 0 : index
    %27 = vector.load %arg2[%c2_13, %c0_14, %c0_15] : memref<4x2x128xf32, #tpu.memory_space<vmem>>, vector<1x2x128xf32>
    %28 = vector.shape_cast %27 : vector<1x2x128xf32> to vector<2x128xf32>
    %29 = vector.shape_cast %26 : vector<2x128xf32> to vector<1x2x128xf32>
    tpu.vector_store %arg2[%c2_13, %c0_14, %c0_15], %29 {strides = array<i32>} : memref<4x2x128xf32, #tpu.memory_space<vmem>>, vector<1x2x128xf32>,
    %30 = arith.mulf %14, %17 : vector<2x128xf32>
    %c3 = arith.constant 3 : index
    %c0_16 = arith.constant 0 : index
    %c0_17 = arith.constant 0 : index
    %31 = vector.load %arg2[%c3, %c0_16, %c0_17] : memref<4x2x128xf32, #tpu.memory_space<vmem>>, vector<1x2x128xf32>
    %32 = vector.shape_cast %31 : vector<1x2x128xf32> to vector<2x128xf32>
    %33 = vector.shape_cast %30 : vector<2x128xf32> to vector<1x2x128xf32>
    tpu.vector_store %arg2[%c3, %c0_16, %c0_17], %33 {strides = array<i32>} : memref<4x2x128xf32, #tpu.memory_space<vmem>>, vector<1x2x128xf32>,
    return
  }
  func.func @transform_0(%arg0: i32) -> (i32, i32, i32) {
    %c0_i32 = arith.constant 0 : i32
    %c0_i32_0 = arith.constant 0 : i32
    %c0_i32_1 = arith.constant 0 : i32
    return %c0_i32, %arg0, %c0_i32_0 : i32, i32, i32
  }
  func.func @transform_1(%arg0: i32) -> (i32, i32, i32) {
    %c0_i32 = arith.constant 0 : i32
    %c0_i32_0 = arith.constant 0 : i32
    %c0_i32_1 = arith.constant 0 : i32
    return %c0_i32, %arg0, %c0_i32_0 : i32, i32, i32
  }
}

</mosaic_0001>

<llo_original>
// kernel: pos_transform_cf.1
$region0: #{pos_transform_cf.1}
  #allocation0 [shape = 'u32[]', space=smem, size = 0x4, offset = 0x4, fixed_abs, tag = 'smem constant byte address 0x4 - core index']
  #allocation1 [shape = 'u32[72,128]{1,0:T(1,128)}', space=vmem, size = 0x9000, scoped, tag = 'internal scratch']
  %s0 = inlined_call_operand.vmem [shape: f32[3,2,128], index: 0, kind: input, shape index: {}]
  %s1 = inlined_call_operand.vmem [shape: f32[4,2,128], index: 1, kind: output, shape index: {}]
  %s2 = sld [smem:[#allocation0]]
  $region14: #{pos_transform_cf.1} parent=0
    _
  %s4 = ssub.s32 1, %s2
  %s5 = scalar_select 0, %s4, %s2
  // Predicated region
  $region2: #{pos_transform_cf.1} parent=0 // pred_check
    _
  $region3: #{pos_transform_cf.1} parent=0 // pred_check_branch
    %7 = sbr.rel (0) target = $region5
  $region4: #{pos_transform_cf.1} parent=0 // pred_region
    _
  $region5: #{pos_transform_cf.1} parent=0 // pred_fallthru
    _
  %v8 = vld [vmem:[%s0] sm:$0x3]
  %s9 = scalar_lea.vmem %s0, 2
  %v10 = vld [vmem:[%s9] sm:$0x3]
  %s11 = scalar_lea.vmem %s0, 4
  %v12 = vld [vmem:[%s11] sm:$0x3]
  %v13 = vmul.f32 %v8, %v8
  %v14 = vmul.f32 %v10, %v10
  %v15 = vadd.f32 %v13, %v14
  %v16 = vmul.f32 %v12, %v12
  %v17 = vadd.f32 %v15, %v16
  %v18 = vadd.f32 %v17, 1e-16
  %v19 = vrsqrt.pop %v18
  %v20 = vmul.f32 %v19, %v18
  %v21 = vmul.f32 %v20, %v19
  %v22 = vmul.f32 0.5, %v21
  %v23 = vsub.f32 1.5, %v22
  %v24 = vmul.f32 %v19, %v23
  %vm25 = vweird.f32 %v18
  %vm26 = vweird.f32 %v19
  %vm27 = vmor %vm25, %vm26
  %v28 = vsel %vm27, %v19, %v24
  %v29 = vmul.f32 %v17, %v28
  %v30 = vadd.f32 %v29, 1.0
  %v31 = vrcp.pop %v30
  %v32 = vmul.f32 %v8, %v28
  %33 = vst [vmem:[%s1] sm:$0x3] %v32
  %v34 = vmul.f32 %v10, %v28
  %s35 = scalar_lea.vmem %s1, 2
  %36 = vst [vmem:[%s35] sm:$0x3] %v34
  %v37 = vmul.f32 %v12, %v28
  %s38 = scalar_lea.vmem %s1, 4
  %39 = vst [vmem:[%s38] sm:$0x3] %v37
  %v40 = vmul.f32 %v29, %v31
  %s41 = scalar_lea.vmem %s1, 6
  %42 = vst [vmem:[%s41] sm:$0x3] %v40
  // Predicated region
  $region6: #{pos_transform_cf.1} parent=0 // pred_check
    _
  $region7: #{pos_transform_cf.1} parent=0 // pred_check_branch
    %44 = sbr.rel (0) target = $region9
  $region8: #{pos_transform_cf.1} parent=0 // pred_region
    _
  $region9: #{pos_transform_cf.1} parent=0 // pred_fallthru
    _
  // Predicated region
  $region10: #{pos_transform_cf.1} parent=0 // pred_check
    _
  $region11: #{pos_transform_cf.1} parent=0 // pred_check_branch
    %46 = sbr.rel (0) target = $region13
  $region12: #{pos_transform_cf.1} parent=0 // pred_region
    _
  $region13: #{pos_transform_cf.1} parent=0 // pred_fallthru
    _

</llo_original>
